<compile_context>
chip_gen: v6e
topology: v6e:2x2x1
jax: 0.10.0
libtpu: 0.0.40
codegen_flags: <defaults>
</compile_context>

<pallas_src>
from typing import NamedTuple

import jax
import jax.numpy as jnp
from jax.experimental import pallas as pl
from jax.experimental.pallas import tpu as pltpu


_PALLAS_MIN_ROWS = 2048    # below this, a fused XLA dot beats a standalone kernel
_MIN_GRID_STEPS = 4        # give v7x's 2 TensorCores >= 2 tiles each
_VMEM_TILE_BUDGET = 40 << 20


def _round_up(x, m):
    return ((x + m - 1) // m) * m


def _cdiv(a, b):
    return (a + b - 1) // b


def _pack_factor(latent_dim, input_dim, max_pack=64):
    """Smallest power-of-two P such that P*input_dim is a multiple of 128
    (lane-dense output stores).  Capped so the packed K stays small."""
    p = 1
    while p <= max_pack:
        if (p * input_dim) % 128 == 0:
            break
        p *= 2
    if p > max_pack or (p * input_dim) % 128 != 0:
        return 1
    if p * latent_dim > 4096:  # keep per-tile K (and the kron'd weight) small
        return 1
    return p


class DecoderParams(NamedTuple):
    w_packed: jax.Array   # (P*latent_dim, P*input_dim), matmul dtype (bf16 default)
    b_packed: jax.Array   # (1, P*input_dim), float32
    weight_t: jax.Array   # (latent_dim, input_dim), original dtype (XLA fallback/tail)
    bias: jax.Array       # (input_dim,)


def pack_decoder_params(weight_t, bias, *, matmul_dtype=jnp.bfloat16):
    """One-time packing of nn.Linear params for the lane-dense kernel."""
    latent_dim, input_dim = weight_t.shape
    P = _pack_factor(latent_dim, input_dim)
    if P > 1:
        w_packed = jnp.kron(jnp.eye(P, dtype=weight_t.dtype), weight_t)
        b_packed = jnp.tile(bias, P).reshape(1, P * input_dim)
    else:
        w_packed = weight_t
        b_packed = bias.reshape(1, input_dim)
    return DecoderParams(
        w_packed=w_packed.astype(matmul_dtype),
        b_packed=b_packed.astype(jnp.float32),
        weight_t=weight_t,
        bias=bias,
    )


def _decoder_kernel(x_ref, w_ref, b_ref, o_ref):
    # x_ref: (TM, Kp)  w_ref: (Kp, Np)  b_ref: (1, Np)  o_ref: (TM, Np)
    # Matmul operands in the (bf16) weight dtype -> full MXU rate even with the
    # P-fold kron FLOP inflation; accumulate and add bias in f32.
    acc = jnp.dot(x_ref[...].astype(w_ref.dtype), w_ref[...],
                  preferred_element_type=jnp.float32)
    o_ref[...] = (acc + b_ref[...]).astype(o_ref.dtype)


def decoder_forward(params, data, *, block_m=4096, force_pallas=False):
    """data: (..., latent_dim) -> (..., input_dim)."""
    *lead, latent_dim = data.shape
    assert latent_dim == params.weight_t.shape[0]
    input_dim = params.weight_t.shape[1]
    P = params.b_packed.shape[1] // input_dim

    M = 1
    for d in lead:
        M *= d
    x2d = data.reshape(M, latent_dim)

    m_packed = M // P                 # complete packed super-rows
    m_main = m_packed * P             # logical rows handled by the kernel
    tail = M - m_main                 # < P rows, handled by XLA

    # Small-problem fast path: pallas_call fixed cost dominates tiny matmuls.
    if m_packed == 0 or (not force_pallas and M < _PALLAS_MIN_ROWS):
        out2d = x2d @ params.weight_t + params.bias
        return out2d.reshape(*lead, input_dim)

    Kp = P * latent_dim
    Np = P * input_dim

    x_itemsize = jnp.dtype(data.dtype).itemsize
    sublane = 8 if x_itemsize >= 4 else (16 if x_itemsize == 2 else 32)

    # ---- tile size ----------------------------------------------------------
    if m_packed <= sublane:
        tm = m_packed                                  # full-dim block (exact)
    else:
        # Big tiles (amortize ~0.35us/step), but keep >= _MIN_GRID_STEPS steps
        # so v7x's 2 TensorCores both get work.
        tm = min(block_m, _cdiv(m_packed, _MIN_GRID_STEPS))
        tm = _round_up(max(tm, sublane), sublane)
        tm = min(tm, _round_up(m_packed, sublane))
        # VMEM safety cap (double-buffered x + out tiles).
        bytes_per_row = Kp * x_itemsize + Np * x_itemsize
        tm_cap = max(sublane,
                     (_VMEM_TILE_BUDGET // (2 * bytes_per_row)) // sublane * sublane)
        tm = min(tm, tm_cap)

    grid = (_cdiv(m_packed, tm),)     # edge block may be partial (masked stores)

    # ---- VMEM budget / compiler params --------------------------------------
    w_bytes = Kp * Np * jnp.dtype(params.w_packed.dtype).itemsize
    b_bytes = Np * 4
    est_vmem = 2 * (tm * Kp * x_itemsize + tm * Np * x_itemsize + w_bytes + b_bytes)
    vmem_limit = None
    if est_vmem > (14 << 20):         # above v5e's 16 MiB scoped default
        vmem_limit = min(est_vmem + (2 << 20), 64 << 20)
    compiler_params = pltpu.CompilerParams(
        # No reduction carried across the M grid axis -> parallel
        # (lets Mosaic shard tiles across v7x's 2 TensorCores).
        dimension_semantics=("parallel",),
        vmem_limit_bytes=vmem_limit,
    )

    # ---- lane-dense packed view (zero-copy when M % P == 0) -----------------
    x_packed = x2d[:m_main].reshape(m_packed, Kp)

    out_packed = pl.pallas_call(
        _decoder_kernel,
        out_shape=jax.ShapeDtypeStruct((m_packed, Np), data.dtype),
        grid_spec=pltpu.PrefetchScalarGridSpec(
            num_scalar_prefetch=0,
            grid=grid,
            in_specs=[
                # streamed input tiles
                pl.BlockSpec((tm, Kp), lambda i: (i, 0)),
                # weight & bias resident in VMEM across all grid steps
                pl.BlockSpec((Kp, Np), lambda i: (0, 0)),
                pl.BlockSpec((1, Np), lambda i: (0, 0)),
            ],
            out_specs=pl.BlockSpec((tm, Np), lambda i: (i, 0)),
        ),
        compiler_params=compiler_params,
    )(x_packed, params.w_packed, params.b_packed)

    out_main = out_packed.reshape(m_main, input_dim)
    if tail:
        out_tail = x2d[m_main:] @ params.weight_t + params.bias
        out2d = jnp.concatenate([out_main, out_tail.astype(out_main.dtype)], axis=0)
    else:
        out2d = out_main
    return out2d.reshape(*lead, input_dim)


def init_decoder_params(key, latent_dim, input_dim, dtype=jnp.float32):
    # Mirrors utils.init_network_weights: normal(std=0.1) weights, zero bias.
    w = jax.random.normal(key, (input_dim, latent_dim), dtype) * 0.1  # PyTorch (out,in)
    b = jnp.zeros((input_dim,), dtype)
    return w.T, b  # store weight transposed (latent_dim, input_dim) for the kernel


if __name__ == "__main__":
    latent_dim = 32
    input_dim = 16
    n_traj_samples, n_traj, n_tp = 2, 8, 64  # M = 1024 rows

    key = jax.random.PRNGKey(0)
    k_data, k_w, k_b, k_data2 = jax.random.split(key, 4)

    data = jax.random.normal(
        k_data, (n_traj_samples, n_traj, n_tp, latent_dim), jnp.float32
    )
    weight_t, bias = init_decoder_params(k_w, latent_dim, input_dim)
    # Use a non-zero bias so the bias-broadcast path is verified.
    bias = jax.random.normal(k_b, (input_dim,), jnp.float32) * 0.05

    ref = data @ weight_t + bias

    # --- bf16-matmul path (default): accumulation f32, operands bf16 ---------
    params_bf16 = pack_decoder_params(weight_t, bias, matmul_dtype=jnp.bfloat16)
    out = decoder_forward(params_bf16, data, force_pallas=True)
    out = jax.block_until_ready(out)
    assert out.shape == (n_traj_samples, n_traj, n_tp, input_dim)
    assert jnp.allclose(out, ref, atol=2e-2, rtol=2e-2)

    # --- f32-matmul path: bit-accurate vs reference ---------------------------
    params_f32 = pack_decoder_params(weight_t, bias, matmul_dtype=jnp.float32)
    out_f32 = decoder_forward(params_f32, data, force_pallas=True)
    out_f32 = jax.block_until_ready(out_f32)
    assert jnp.allclose(out_f32, ref, atol=1e-5, rtol=1e-5)

    # --- ragged M (rows not a multiple of the pack factor / tile size) --------
    data2 = jax.random.normal(k_data2, (3, 7, latent_dim), jnp.float32)
    out2 = decoder_forward(params_f32, data2, force_pallas=True)
    out2 = jax.block_until_ready(out2)
    ref2 = data2 @ weight_t + bias
    assert out2.shape == (3, 7, input_dim)
    assert jnp.allclose(out2, ref2, atol=1e-5, rtol=1e-5)

    print("KERNEL_OK")
</pallas_src>

<mosaic_0001>
module attributes {stable_mosaic.version = 11 : i64} {
  func.func @_decoder_kernel(%arg0: i32, %arg1: memref<32x256xf32, #tpu.memory_space<vmem>>, %arg2: memref<256x128xbf16, #tpu.memory_space<vmem>>, %arg3: memref<1x128xf32, #tpu.memory_space<vmem>>, %arg4: memref<32x128xf32, #tpu.memory_space<vmem>>) attributes {dimension_semantics = [#tpu.dimension_semantics<parallel>], iteration_bounds = array<i64: 4>, scalar_prefetch = 0 : i64, scratch_operands = 0 : i64, tpu.core_type = #tpu.core_type<tc>, window_params = [{transform_indices = @transform_0, window_bounds = array<i64: 32, 256>}, {pipeline_mode = #tpu.pipeline_mode<synchronous>, transform_indices = @transform_1, window_bounds = array<i64: 256, 128>}, {pipeline_mode = #tpu.pipeline_mode<synchronous>, transform_indices = @transform_2, window_bounds = array<i64: 1, 128>}, {transform_indices = @transform_3, window_bounds = array<i64: 32, 128>}]} {
    %c0 = arith.constant 0 : index
    %c0_0 = arith.constant 0 : index
    %0 = vector.load %arg1[%c0, %c0_0] : memref<32x256xf32, #tpu.memory_space<vmem>>, vector<32x256xf32>
    %1 = arith.truncf %0 : vector<32x256xf32> to vector<32x256xbf16>
    %c0_1 = arith.constant 0 : index
    %c0_2 = arith.constant 0 : index
    %2 = vector.load %arg2[%c0_1, %c0_2] : memref<256x128xbf16, #tpu.memory_space<vmem>>, vector<256x128xbf16>
    %cst = arith.constant dense<0.000000e+00> : vector<32x128xf32>
    %3 = tpu.matmul %1, %2, %cst {dimension_numbers = #tpu.dot_dimension_numbers<[1], [0], [0], [1], [0, 0, 1, 1], [], []>} : vector<32x256xbf16>, vector<256x128xbf16>, vector<32x128xf32> -> vector<32x128xf32>
    %c0_3 = arith.constant 0 : index
    %c0_4 = arith.constant 0 : index
    %4 = vector.load %arg3[%c0_3, %c0_4] : memref<1x128xf32, #tpu.memory_space<vmem>>, vector<1x128xf32>
    %5 = vector.broadcast %4 : vector<1x128xf32> to vector<32x128xf32>
    %6 = arith.addf %3, %5 : vector<32x128xf32>
    %c0_5 = arith.constant 0 : index
    %c0_6 = arith.constant 0 : index
    %7 = vector.load %arg4[%c0_5, %c0_6] : memref<32x128xf32, #tpu.memory_space<vmem>>, vector<32x128xf32>
    tpu.vector_store %arg4[%c0_5, %c0_6], %6 {strides = array<i32>} : memref<32x128xf32, #tpu.memory_space<vmem>>, vector<32x128xf32>,
    return
  }
  func.func @transform_0(%arg0: i32) -> (i32, i32) {
    %c0_i32 = arith.constant 0 : i32
    %c0_i32_0 = arith.constant 0 : i32
    return %arg0, %c0_i32 : i32, i32
  }
  func.func @transform_1(%arg0: i32) -> (i32, i32) {
    %c0_i32 = arith.constant 0 : i32
    %c0_i32_0 = arith.constant 0 : i32
    %c0_i32_1 = arith.constant 0 : i32
    return %c0_i32, %c0_i32_0 : i32, i32
  }
  func.func @transform_2(%arg0: i32) -> (i32, i32) {
    %c0_i32 = arith.constant 0 : i32
    %c0_i32_0 = arith.constant 0 : i32
    %c0_i32_1 = arith.constant 0 : i32
    return %c0_i32, %c0_i32_0 : i32, i32
  }
  func.func @transform_3(%arg0: i32) -> (i32, i32) {
    %c0_i32 = arith.constant 0 : i32
    %c0_i32_0 = arith.constant 0 : i32
    return %arg0, %c0_i32 : i32, i32
  }
}

</mosaic_0001>

<llo_original>
// kernel: tpu_custom_call.1
$region0: #{tpu_custom_call.1}
  #allocation0 [shape = 'u32[]', space=smem, size = 0x4, offset = 0x4, fixed_abs, tag = 'smem constant byte address 0x4 - core index']
  #allocation1 [shape = 'u32[144,128]{1,0:T(1,128)}', space=vmem, size = 0x12000, scoped, tag = 'internal scratch']
  %s0 = inlined_call_operand.hbm [shape: f32[128,256], index: 0, kind: input, shape index: {}]
  %s1 = inlined_call_operand.hbm [shape: bf16[256,128], index: 1, kind: input, shape index: {}]
  %s2 = inlined_call_operand.vmem [shape: f32[1,128], index: 2, kind: input, shape index: {}]
  %s3 = inlined_call_operand.hbm [shape: f32[128,128], index: 3, kind: output, shape index: {}]
  %s4 = sld [smem:[#allocation0]]
  $region53: #{tpu_custom_call.1} parent=0
    _
  %s6 = ssub.s32 1, %s4
  %s7 = scalar_select 0, %s6, %s4
  $region1: #{tpu_custom_call.1} parent=0
    #allocation2 [shape = 'u8[65536]{0}', space=vmem, size = 0x10000, scoped, tag = 'input window, operand 0']
    #allocation3 [shape = 's32[2]{0}', space=sflag, size = 0x8, scoped, tag = 'scoped memory for tpu_custom_call.1']
    #allocation4 [shape = 's32[2]{0}', space=sflag, size = 0x8, scoped, tag = 'scoped memory for tpu_custom_call.1']
    #allocation5 [shape = 'u8[65536]{0}', space=vmem, size = 0x10000, scoped, tag = 'input window, operand 1, single buffered']
    #allocation6 [shape = 's32[1]{0}', space=sflag, size = 0x4, scoped, tag = 'scoped memory for tpu_custom_call.1']
    #allocation7 [shape = 'u8[32768]{0}', space=vmem, size = 0x8000, scoped, tag = 'output window, operand 0']
    %8 = vsyncpa [#allocation3], 0
    %s9 = scalar_lea.sflag [#allocation3], 1
    %10 = vsyncpa %s9, 0
    %11 = vsyncpa [#allocation6], 0
    %12 = vsyncpa [#allocation4], 0
    %s13 = scalar_lea.sflag [#allocation4], 1
    %14 = vsyncpa %s13, 0
    loop: start=0, step=1, limit=6
    $region2: #{tpu_custom_call.1} parent=1 // loop_pre_header
      _
    $region3: #{tpu_custom_call.1} parent=1 // loop_header
      %s16 = sphi 0, %s20
      %p17 = scmp.ge.s32.totalorder %s16, 6
      %s26 = sphi 0, %s28
      %s29 = sphi 0, %s26
      %s30 = sphi 0, %s29
      %s46 = sphi 0, %s30
      %s50 = sphi 0, %s50
      %s52 = sphi 0, %s50
      %s53 = sphi 0, %s52
      %s67 = sphi 0, %s53
      %s71 = sphi 0, %s71
      %s73 = sphi 0, %s71
      %s74 = sphi 0, %s73
      %s88 = sphi 0, %s74
      %s94 = sphi 0, %s96
      %s97 = sphi 0, %s94
      %s98 = sphi 0, %s97
      %s114 = sphi 0, %s98
    $region4: #{tpu_custom_call.1} parent=1 // loop_header_branch
      %19 = sbr.rel (%p17) target = $region8
    $region5: #{tpu_custom_call.1} parent=1 // loop_body
      %s21 = ssub.s32 %s16, 1
      %s22 = ssub.s32 %s16, 2
      %s23 = sadd.s32 %s16, 1
      %s24 = ssub.s32 %s16, %s23
      %p25 = scmp.eq.s32.totalorder %s24, 0
      %s27 = sadd.s32 %s26, 1
      %s28 = scalar_select %p25, %s26, %s27
      %p31 = pneg %p25
      %p32 = scmp.eq.s32.totalorder %s16, 3
      %p33 = por %p31, %p32
      %p34 = scmp.ne.s32.totalorder %s26, %s29
      %p35 = scmp.eq.s32.totalorder %s16, 0
      %p36 = por %p34, %p35
      %p37 = scmp.ne.s32.totalorder %s26, %s29
      %p38 = scmp.eq.s32.totalorder %s21, 3
      %p39 = por %p37, %p38
      %p40 = scmp.ne.s32.totalorder %s29, %s30
      %p41 = scmp.eq.s32.totalorder %s21, 0
      %p42 = por %p40, %p41
      %p43 = scmp.ne.s32.totalorder %s29, %s30
      %p44 = scmp.eq.s32.totalorder %s22, 3
      %p45 = por %p43, %p44
      %p47 = scmp.ne.s32.totalorder %s30, %s46
      %p48 = scmp.eq.s32.totalorder %s22, 0
      %p49 = por %p47, %p48
      %s51 = sadd.s32 %s50, 1
      %p54 = scmp.eq.s32.totalorder %s16, 3
      %p55 = scmp.ne.s32.totalorder %s50, %s52
      %p56 = scmp.eq.s32.totalorder %s16, 0
      %p57 = por %p55, %p56
      %p58 = scmp.ne.s32.totalorder %s50, %s52
      %p59 = scmp.eq.s32.totalorder %s21, 3
      %p60 = por %p58, %p59
      %p61 = scmp.ne.s32.totalorder %s52, %s53
      %p62 = scmp.eq.s32.totalorder %s21, 0
      %p63 = por %p61, %p62
      %p64 = scmp.ne.s32.totalorder %s52, %s53
      %p65 = scmp.eq.s32.totalorder %s22, 3
      %p66 = por %p64, %p65
      %p68 = scmp.ne.s32.totalorder %s53, %s67
      %p69 = scmp.eq.s32.totalorder %s22, 0
      %p70 = por %p68, %p69
      %s72 = sadd.s32 %s71, 1
      %p75 = scmp.eq.s32.totalorder %s16, 3
      %p76 = scmp.ne.s32.totalorder %s71, %s73
      %p77 = scmp.eq.s32.totalorder %s16, 0
      %p78 = por %p76, %p77
      %p79 = scmp.ne.s32.totalorder %s71, %s73
      %p80 = scmp.eq.s32.totalorder %s21, 3
      %p81 = por %p79, %p80
      %p82 = scmp.ne.s32.totalorder %s73, %s74
      %p83 = scmp.eq.s32.totalorder %s21, 0
      %p84 = por %p82, %p83
      %p85 = scmp.ne.s32.totalorder %s73, %s74
      %p86 = scmp.eq.s32.totalorder %s22, 3
      %p87 = por %p85, %p86
      %p89 = scmp.ne.s32.totalorder %s74, %s88
      %p90 = scmp.eq.s32.totalorder %s22, 0
      %p91 = por %p89, %p90
      %s92 = ssub.s32 %s16, %s23
      %p93 = scmp.eq.s32.totalorder %s92, 0
      %s95 = sadd.s32 %s94, 1
      %s96 = scalar_select %p93, %s94, %s95
      %p99 = pneg %p93
      %p100 = scmp.eq.s32.totalorder %s16, 3
      %p101 = por %p99, %p100
      %p102 = scmp.ne.s32.totalorder %s94, %s97
      %p103 = scmp.eq.s32.totalorder %s16, 0
      %p104 = por %p102, %p103
      %p105 = scmp.ne.s32.totalorder %s94, %s97
      %p106 = scmp.eq.s32.totalorder %s21, 3
      %p107 = por %p105, %p106
      %p108 = scmp.ne.s32.totalorder %s97, %s98
      %p109 = scmp.eq.s32.totalorder %s21, 0
      %p110 = por %p108, %p109
      %p111 = scmp.ne.s32.totalorder %s97, %s98
      %p112 = scmp.eq.s32.totalorder %s22, 3
      %p113 = por %p111, %p112
      %p115 = scmp.ne.s32.totalorder %s98, %s114
      %p116 = scmp.eq.s32.totalorder %s22, 0
      %p117 = por %p115, %p116
      %p118 = scmp.le.s32.totalorder 1, %s16
      %p119 = scmp.lt.s32.totalorder %s16, 5
      %p120 = pnand %p118, %p119
      %p121 = pneg %p120
      // Predicated region
      $region9: #{tpu_custom_call.1} parent=5 // pred_check
        _
      $region10: #{tpu_custom_call.1} parent=5 // pred_check_branch
        %123 = sbr.rel (%p120) target = $region12
      $region11: #{tpu_custom_call.1} parent=5 // pred_region
        %s124 = ssub.s32 %s16, 1
        // Predicated region
        $region13: #{tpu_custom_call.1} parent=11 // pred_check
          %p125 = pneg %p63
        $region14: #{tpu_custom_call.1} parent=11 // pred_check_branch
          %127 = sbr.rel (%p125) target = $region16
        $region15: #{tpu_custom_call.1} parent=11 // pred_region
          %s129 = ssub.s32 2048, 2048
          %130 = vsyncadd [#allocation6], %s129
          %s131 = sshll.u32 [#allocation5], 4
          %s132 = int_to_ptr.vmem [resolvable:$true] %s131
          %137 = dma.hbm_to_vmem [thread:$0]  %s1, 2048, %s132, [#allocation6], 64, 64, 4
        $region16: #{tpu_custom_call.1} parent=11 // pred_fallthru
          _
        // Predicated region
        $region17: #{tpu_custom_call.1} parent=11 // pred_check
          %p138 = pneg %p84
        $region18: #{tpu_custom_call.1} parent=11 // pred_check_branch
          %140 = sbr.rel (%p138) target = $region20
        $region19: #{tpu_custom_call.1} parent=11 // pred_region
          _
        $region20: #{tpu_custom_call.1} parent=11 // pred_fallthru
          _
      $region12: #{tpu_custom_call.1} parent=5 // pred_fallthru
        _
      %p141 = scmp.lt.s32.totalorder %s16, 4
      // Predicated region
      $region21: #{tpu_custom_call.1} parent=5 // pred_check
        %p142 = pneg %p141
      $region22: #{tpu_custom_call.1} parent=5 // pred_check_branch
        %144 = sbr.rel (%p142) target = $region24
      $region23: #{tpu_custom_call.1} parent=5 // pred_region
        // Predicated region
        $region25: #{tpu_custom_call.1} parent=23 // pred_check
          %p145 = pneg %p36
        $region26: #{tpu_custom_call.1} parent=23 // pred_check_branch
          %147 = sbr.rel (%p145) target = $region28
        $region27: #{tpu_custom_call.1} parent=23 // pred_region
          %s148 = sand.u32 %s26, 1
          %s149 = scalar_lea.sflag [#allocation3], %s148
          %s150 = sand.u32 %s26, 1
          %s151 = smul.addr %s150, 64
          %s152 = scalar_lea.vmem [#allocation2], %s151
          %s153 = smul.u32 4, %s16
          %s155 = ssub.s32 1024, 1024
          %156 = vsyncadd %s149, %s155
          %s157 = smul.addr %s153, 2
          %s158 = smul.addr %s157, 128
          %s159 = scalar_lea.hbm %s0, %s158
          %s160 = sshll.u32 %s152, 4
          %s161 = int_to_ptr.vmem [resolvable:$true] %s160
          %166 = dma.hbm_to_vmem [thread:$0]  %s159, 1024, %s161, %s149, 256, 256, 16
        $region28: #{tpu_custom_call.1} parent=23 // pred_fallthru
          _
      $region24: #{tpu_custom_call.1} parent=5 // pred_fallthru
        _
      %p167 = scmp.le.s32.totalorder 1, %s16
      %p168 = scmp.lt.s32.totalorder %s16, 5
      %p169 = pnand %p167, %p168
      %p170 = pneg %p169
      // Predicated region
      $region29: #{tpu_custom_call.1} parent=5 // pred_check
        _
      $region30: #{tpu_custom_call.1} parent=5 // pred_check_branch
        %172 = sbr.rel (%p169) target = $region32
      $region31: #{tpu_custom_call.1} parent=5 // pred_region
        %s173 = ssub.s32 %s16, 1
        %s174 = sand.u32 %s29, 1
        %s175 = scalar_lea.sflag [#allocation3], %s174
        %s176 = sand.u32 %s29, 1
        %s177 = smul.addr %s176, 64
        %s178 = scalar_lea.vmem [#allocation2], %s177
        // Predicated region
        $region33: #{tpu_custom_call.1} parent=31 // pred_check
          %p179 = pneg %p42
        $region34: #{tpu_custom_call.1} parent=31 // pred_check_branch
          %181 = sbr.rel (%p179) target = $region36
        $region35: #{tpu_custom_call.1} parent=31 // pred_region
          %182 = dma.done %s175, 1024
        $region36: #{tpu_custom_call.1} parent=31 // pred_fallthru
          _
        // Predicated region
        $region37: #{tpu_custom_call.1} parent=31 // pred_check
          %p183 = pneg %p63
        $region38: #{tpu_custom_call.1} parent=31 // pred_check_branch
          %185 = sbr.rel (%p183) target = $region40
        $region39: #{tpu_custom_call.1} parent=31 // pred_region
          %186 = dma.done [#allocation6], 2048
        $region40: #{tpu_custom_call.1} parent=31 // pred_fallthru
          _
        %s187 = sand.u32 %s29, 1
        %s188 = scalar_lea.sflag [#allocation3], %s187
        %s189 = sand.u32 %s29, 1
        %s190 = smul.addr %s189, 64
        %s191 = scalar_lea.vmem [#allocation2], %s190
        %p192 = pneg %p42
        %p193 = pneg %p39
        %p194 = pneg %p63
        %p195 = pneg %p60
        %p196 = pneg %p84
        %p197 = pneg %p81
        %p198 = pneg %p110
        %p199 = pneg %p107
        %s200 = sand.u32 %s97, 1
        %s201 = scalar_lea.sflag [#allocation4], %s200
        %s202 = sand.u32 %s97, 1
        %s203 = smul.addr %s202, 32
        %s204 = scalar_lea.vmem [#allocation7], %s203
        %s205 = smul.u32 4, %s21
        %s206 = smul.u32 4, %s21
        %v208 = vld [vmem:[%s178] sm:$0xff]
        %v209 = vld [vmem:[%s178 + $0x8] sm:$0xff]
        %v210 = vld [vmem:[%s178 + $0x10] sm:$0xff]
        %v211 = vld [vmem:[%s178 + $0x18] sm:$0xff]
        %v212 = vld [vmem:[%s178 + $0x20] sm:$0xff]
        %v213 = vld [vmem:[%s178 + $0x28] sm:$0xff]
        %v214 = vld [vmem:[%s178 + $0x30] sm:$0xff]
        %v215 = vld [vmem:[%s178 + $0x38] sm:$0xff]
        %v216 = vpack.c.bf16 %v210, %v208
        %v217 = vpack.c.bf16 %v211, %v209
        %v218 = vpack.c.bf16 %v214, %v212
        %v219 = vpack.c.bf16 %v215, %v213
        %v220 = vld [vmem:[#allocation5] sm:$0xf]
        %v221 = vld [vmem:[#allocation5 + $0x4] sm:$0xf]
        %v222 = vld [vmem:[#allocation5 + $0x8] sm:$0xf]
        %v223 = vld [vmem:[#allocation5 + $0xc] sm:$0xf]
        %v224 = vld [vmem:[#allocation5 + $0x10] sm:$0xf]
        %v225 = vld [vmem:[#allocation5 + $0x14] sm:$0xf]
        %v226 = vld [vmem:[#allocation5 + $0x18] sm:$0xf]
        %v227 = vld [vmem:[#allocation5 + $0x1c] sm:$0xf]
        %v228 = vld [vmem:[#allocation5 + $0x20] sm:$0xf]
        %v229 = vld [vmem:[#allocation5 + $0x24] sm:$0xf]
        %v230 = vld [vmem:[#allocation5 + $0x28] sm:$0xf]
        %v231 = vld [vmem:[#allocation5 + $0x2c] sm:$0xf]
        %v232 = vld [vmem:[#allocation5 + $0x30] sm:$0xf]
        %v233 = vld [vmem:[#allocation5 + $0x34] sm:$0xf]
        %v234 = vld [vmem:[#allocation5 + $0x38] sm:$0xf]
        %v235 = vld [vmem:[#allocation5 + $0x3c] sm:$0xf]
        %v236 = vld [vmem:[#allocation5 + $0x40] sm:$0xf]
        %v237 = vld [vmem:[#allocation5 + $0x44] sm:$0xf]
        %v238 = vld [vmem:[#allocation5 + $0x48] sm:$0xf]
        %v239 = vld [vmem:[#allocation5 + $0x4c] sm:$0xf]
        %v240 = vld [vmem:[#allocation5 + $0x50] sm:$0xf]
        %v241 = vld [vmem:[#allocation5 + $0x54] sm:$0xf]
        %v242 = vld [vmem:[#allocation5 + $0x58] sm:$0xf]
        %v243 = vld [vmem:[#allocation5 + $0x5c] sm:$0xf]
        %v244 = vld [vmem:[#allocation5 + $0x60] sm:$0xf]
        %v245 = vld [vmem:[#allocation5 + $0x64] sm:$0xf]
        %v246 = vld [vmem:[#allocation5 + $0x68] sm:$0xf]
        %v247 = vld [vmem:[#allocation5 + $0x6c] sm:$0xf]
        %v248 = vld [vmem:[#allocation5 + $0x70] sm:$0xf]
        %v249 = vld [vmem:[#allocation5 + $0x74] sm:$0xf]
        %v250 = vld [vmem:[#allocation5 + $0x78] sm:$0xf]
        %v251 = vld [vmem:[#allocation5 + $0x7c] sm:$0xf]
        %v252 = vld [vmem:[%s2] sm:$0x1]
        %v254 = vlaneseq
        %v255 = vshrl.u32 %v254, 7
        %v256 = vsub.s32 0, %v255
        %v257 = vrot.slane %v252, %v256
        %v291 = vunpack.c.l.b16 %v220
        %v292 = vunpack.c.l.b16 %v221
        %v293 = vunpack.c.l.b16 %v222
        %v294 = vunpack.c.l.b16 %v223
        %v295 = vunpack.c.l.b16 %v224
        %v296 = vunpack.c.l.b16 %v225
        %v297 = vunpack.c.l.b16 %v226
        %v298 = vunpack.c.l.b16 %v227
        %v299 = vunpack.c.l.b16 %v228
        %v300 = vunpack.c.l.b16 %v229
        %v301 = vunpack.c.l.b16 %v230
        %v302 = vunpack.c.l.b16 %v231
        %v303 = vunpack.c.l.b16 %v232
        %v304 = vunpack.c.l.b16 %v233
        %v305 = vunpack.c.l.b16 %v234
        %v306 = vunpack.c.l.b16 %v235
        %v307 = vunpack.c.l.b16 %v236
        %v308 = vunpack.c.l.b16 %v237
        %v309 = vunpack.c.l.b16 %v238
        %v310 = vunpack.c.l.b16 %v239
        %v311 = vunpack.c.l.b16 %v240
        %v312 = vunpack.c.l.b16 %v241
        %v313 = vunpack.c.l.b16 %v242
        %v314 = vunpack.c.l.b16 %v243
        %v315 = vunpack.c.l.b16 %v244
        %v316 = vunpack.c.l.b16 %v245
        %v317 = vunpack.c.l.b16 %v246
        %v318 = vunpack.c.l.b16 %v247
        %v319 = vunpack.c.l.b16 %v248
        %v320 = vunpack.c.l.b16 %v249
        %v321 = vunpack.c.l.b16 %v250
        %v322 = vunpack.c.l.b16 %v251
        %v323 = vpack.c.b16 %v292, %v291
        %v324 = vpack.c.b16 %v294, %v293
        %v325 = vpack.c.b16 %v296, %v295
        %v326 = vpack.c.b16 %v298, %v297
        %v327 = vpack.c.b16 %v300, %v299
        %v328 = vpack.c.b16 %v302, %v301
        %v329 = vpack.c.b16 %v304, %v303
        %v330 = vpack.c.b16 %v306, %v305
        %v331 = vpack.c.b16 %v308, %v307
        %v332 = vpack.c.b16 %v310, %v309
        %v333 = vpack.c.b16 %v312, %v311
        %v334 = vpack.c.b16 %v314, %v313
        %v335 = vpack.c.b16 %v316, %v315
        %v336 = vpack.c.b16 %v318, %v317
        %v337 = vpack.c.b16 %v320, %v319
        %v338 = vpack.c.b16 %v322, %v321
        %355 = vmatprep.subr.bf16.mxu0 0
        %356 = vmatpush1.bf16.msra.mxu0 %v330
        %357 = vmatprep.subr.bf16.mxu0 0
        %358 = vmatpush1.bf16.msra.mxu0 %v329
        %359 = vmatprep.subr.bf16.mxu0 0
        %360 = vmatpush1.bf16.msra.mxu0 %v328
        %361 = vmatprep.subr.bf16.mxu0 0
        %362 = vmatpush1.bf16.msra.mxu0 %v327
        %363 = vmatprep.subr.bf16.mxu0 0
        %364 = vmatpush1.bf16.msra.mxu0 %v326
        %365 = vmatprep.subr.bf16.mxu0 0
        %366 = vmatpush1.bf16.msra.mxu0 %v325
        %367 = vmatprep.subr.bf16.mxu0 0
        %368 = vmatpush1.bf16.msra.mxu0 %v324
        %369 = vmatprep.subr.bf16.mxu0 0
        %370 = vmatpush1.bf16.msra.mxu0 %v323
        %371 = vmatprep.subr.bf16.mxu0 0
        %372 = vmatpush2.bf16.msra.mxu0 %v338
        %373 = vmatprep.subr.bf16.mxu0 0
        %374 = vmatpush2.bf16.msra.mxu0 %v337
        %375 = vmatprep.subr.bf16.mxu0 0
        %376 = vmatpush2.bf16.msra.mxu0 %v336
        %377 = vmatprep.subr.bf16.mxu0 0
        %378 = vmatpush2.bf16.msra.mxu0 %v335
        %379 = vmatprep.subr.bf16.mxu0 0
        %380 = vmatpush2.bf16.msra.mxu0 %v334
        %381 = vmatprep.subr.bf16.mxu0 0
        %382 = vmatpush2.bf16.msra.mxu0 %v333
        %383 = vmatprep.subr.bf16.mxu0 0
        %384 = vmatpush2.bf16.msra.mxu0 %v332
        %385 = vmatprep.subr.bf16.mxu0 0
        %386 = vmatpush2.bf16.msra.mxu0 %v331
        %387 = vmatprep.mubr.bf16.mxu0 %v217
        %388 = vmatmul.mubr.bf16.gmra.mxu0 %v216
        %v389 = vpop.f32.mrf.mxu0
        %v390 = vadd.f32 %v257, %v389
        %v391 = vpop.f32.mrf.mxu0
        %v392 = vpop.f32.mrf.mxu0
        %v393 = vadd.f32 %v257, %v392
        %v394 = vpop.f32.mrf.mxu0
        %395 = vmatprep.mubr.bf16.mxu0 %v219
        %396 = vmatmul.mubr.bf16.gmra.mxu0 %v218
        %v397 = vpop.f32.mrf.mxu0
        %v398 = vadd.f32 %v257, %v397
        %v399 = vpop.f32.mrf.mxu0
        %v400 = vpop.f32.mrf.mxu0
        %v401 = vadd.f32 %v257, %v400
        %v402 = vpop.f32.mrf.mxu0
        %403 = vdwg.mxu0
        %404 = vst [vmem:[%s204] sm:$0xff] %v390
        %405 = vst [vmem:[%s204 + $0x8] sm:$0xff] %v393
        %406 = vst [vmem:[%s204 + $0x10] sm:$0xff] %v398
        %407 = vst [vmem:[%s204 + $0x18] sm:$0xff] %v401
        %s408 = sand.u32 %s97, 1
        %s409 = scalar_lea.sflag [#allocation4], %s408
        %s410 = sand.u32 %s97, 1
        %s411 = smul.addr %s410, 32
        %s412 = scalar_lea.vmem [#allocation7], %s411
        // Predicated region
        $region41: #{tpu_custom_call.1} parent=31 // pred_check
          %p413 = pneg %p107
        $region42: #{tpu_custom_call.1} parent=31 // pred_check_branch
          %415 = sbr.rel (%p413) target = $region44
        $region43: #{tpu_custom_call.1} parent=31 // pred_region
          %s416 = smul.u32 4, %s21
          %s418 = ssub.s32 512, 512
          %419 = vsyncadd %s409, %s418
          %s420 = smul.addr %s416, 128
          %s421 = scalar_lea.hbm %s3, %s420
          %s422 = sshll.u32 %s412, 4
          %s423 = int_to_ptr.vmem [resolvable:$true] %s422
          %428 = dma.vmem_to_hbm [thread:$0]  %s423, 512, %s421, %s409, 128, 128, 8
        $region44: #{tpu_custom_call.1} parent=31 // pred_fallthru
          _
      $region32: #{tpu_custom_call.1} parent=5 // pred_fallthru
        _
      %p429 = scmp.le.s32.totalorder 2, %s16
      // Predicated region
      $region45: #{tpu_custom_call.1} parent=5 // pred_check
        %p430 = pneg %p429
      $region46: #{tpu_custom_call.1} parent=5 // pred_check_branch
        %432 = sbr.rel (%p430) target = $region48
      $region47: #{tpu_custom_call.1} parent=5 // pred_region
        %s433 = ssub.s32 %s16, 2
        // Predicated region
        $region49: #{tpu_custom_call.1} parent=47 // pred_check
          %p434 = pneg %p113
        $region50: #{tpu_custom_call.1} parent=47 // pred_check_branch
          %436 = sbr.rel (%p434) target = $region52
        $region51: #{tpu_custom_call.1} parent=47 // pred_region
          %s437 = sand.u32 %s98, 1
          %s438 = scalar_lea.sflag [#allocation4], %s437
          %s439 = sand.u32 %s98, 1
          %s440 = smul.addr %s439, 32
          %s441 = scalar_lea.vmem [#allocation7], %s440
          %442 = dma.done %s438, 512
        $region52: #{tpu_custom_call.1} parent=47 // pred_fallthru
          _
      $region48: #{tpu_custom_call.1} parent=5 // pred_fallthru
        _
    $region6: #{tpu_custom_call.1} parent=1 // loop_footer
      %s20 = sadd.s32 1, %s16
    $region7: #{tpu_custom_call.1} parent=1 // loop_footer_branch
      %15 = sbr.rel target = $region3
    $region8: #{tpu_custom_call.1} parent=1 // loop_exit
      _
    %443 = vsyncpa [#allocation3], 1
    %s444 = scalar_lea.sflag [#allocation3], 1
    %445 = vsyncpa %s444, 1
    %446 = vsyncpa [#allocation6], 1
    %447 = vsyncpa [#allocation4], 1
    %s448 = scalar_lea.sflag [#allocation4], 1
    %449 = vsyncpa %s448, 1

</llo_original>
